<compile_context>
chip_gen: v7x
topology: tpu7x:2x2x1
jax: 0.10.0
libtpu: 0.0.40
codegen_flags: <defaults>
</compile_context>

<pallas_src>
import functools
import math

import jax
import jax.numpy as jnp
from jax import lax
from jax.experimental import pallas as pl
from jax.experimental.pallas import tpu as pltpu

_SQRT_HALF = 1.0 / math.sqrt(2.0)


def _gelu_exact(h):
    # torch.nn.GELU() default = exact erf form; math stays f32.
    return 0.5 * h * (1.0 + lax.erf(h * _SQRT_HALF))


# ---------------------------------------------------------------------------
# Kernel bodies
# ---------------------------------------------------------------------------

def _ffn_stream_kernel(x_ref, w1_ref, w2_ref, o_ref, acc_ref):
    # Streaming path.
    # x_ref  : (tm, D)   token tile
    # w1_ref : (D, th)   c_fc weight slice
    # w2_ref : (th, D)   c_proj weight slice
    # o_ref  : (tm, D)
    # acc_ref: (tm, D) f32 accumulator, resident across the hidden grid axis
    h_idx = pl.program_id(1)

    @pl.when(h_idx == 0)
    def _():
        acc_ref[...] = jnp.zeros_like(acc_ref)

    # c_fc slice: native-dtype operands, f32 accumulate on the MXU.
    h = jnp.dot(x_ref[...], w1_ref[...], preferred_element_type=jnp.float32)
    h = _gelu_exact(h)
    # c_proj slice: cast activation back to the weight dtype (bf16 keeps the
    # MXU at full rate); accumulate the (tm, D) partial product in f32.
    acc_ref[...] += jnp.dot(h.astype(w2_ref.dtype), w2_ref[...],
                            preferred_element_type=jnp.float32)

    @pl.when(h_idx == pl.num_programs(1) - 1)
    def _():
        o_ref[...] = acc_ref[...].astype(o_ref.dtype)


def _ffn_resident_kernel(x_ref, w1_ref, w2_ref, o_ref):
    # Fast path: W1/W2 fully VMEM-resident (DMA'd once per call).
    h = jnp.dot(x_ref[...], w1_ref[...], preferred_element_type=jnp.float32)
    h = _gelu_exact(h)
    o_ref[...] = jnp.dot(h.astype(w2_ref.dtype), w2_ref[...],
                         preferred_element_type=jnp.float32).astype(o_ref.dtype)


# ---------------------------------------------------------------------------
# Host-side tiling helpers
# ---------------------------------------------------------------------------

def _round_up(x, m):
    return ((x + m - 1) // m) * m


def _pick_hidden_tile(H, block_hidden):
    """Largest lane-aligned (multiple of 128) divisor of H that is <= block_hidden."""
    th = min(block_hidden, H)
    th = max(128, (th // 128) * 128)
    while th > 128 and H % th:
        th -= 128
    if H % th:
        th = H  # equals full dim -> still a legal block
    return th


@functools.lru_cache(maxsize=1)
def _vmem_capacity_bytes():
    try:
        info = pltpu.get_tpu_info()
        cap = getattr(info, "vmem_capacity_bytes", None)
        if cap:
            return int(cap)
    except Exception:
        pass
    return 64 << 20  # conservative fallback (v7x-sized VMEM)


# ---------------------------------------------------------------------------
# Public wrapper
# ---------------------------------------------------------------------------

@functools.partial(
    jax.jit,
    static_argnames=("block_tokens", "block_hidden", "force_streaming"))
def feed_forward_nn(x, w1, w2, *, block_tokens=None, block_hidden=None,
                    force_streaming=False):
    """y = GELU(x @ W1) @ W2   (Dropout: eval-mode identity).

    x: (B, S, D); w1: (D, 4*D); w2: (4*D, D), pre-transposed (in, out).
    Prefer bf16 operands (full-rate MXU on all generations; f32 operands cost
    2-4x MXU throughput). GELU math and accumulation are always f32.
    """
    B, S, D = x.shape
    H = w1.shape[1]
    tokens = B * S
    x2d = x.reshape(tokens, D)

    x_isz = jnp.dtype(x.dtype).itemsize
    w_isz = jnp.dtype(w1.dtype).itemsize
    o_isz = x_isz

    # Per-generation VMEM budget: ~100 MiB on 128-MiB parts (v5e/v6e),
    # <=48 MiB on 64-MiB parts (v7x); headroom left for compiler temporaries.
    vmem_cap = _vmem_capacity_bytes()
    small_vmem = vmem_cap <= (64 << 20)
    vmem_budget = min(vmem_cap - (16 << 20),
                      (48 << 20) if small_vmem else (100 << 20))
    vmem_budget = max(vmem_budget, 32 << 20)

    # Per-generation tile defaults: tm is the arithmetic-intensity knob when
    # weights stream; th amortizes per-step overhead.
    if block_tokens is None:
        block_tokens = 512 if small_vmem else 1024
    if block_hidden is None:
        block_hidden = 512 if small_vmem else 1024

    # Token tile: sublane-aligned, capped at the available tokens.
    tm = min(block_tokens, _round_up(tokens, 8))
    # Megacore: keep >= 2 token tiles when there is enough work so the
    # "parallel" axis splits across both TensorCores on v7x.
    if tokens > 512 and pl.cdiv(tokens, tm) < 2:
        tm = _round_up(pl.cdiv(tokens, 2), 8)

    flops = 4 * tokens * D * H
    transcendentals = tokens * H

    # ---- fast path: weights fully VMEM-resident ---------------------------
    resident_bytes = (
        2 * (D * H + H * D) * w_isz       # W1 + W2 (count double buffers)
        + 2 * tm * D * x_isz              # x tiles (double-buffered)
        + 2 * tm * D * o_isz              # out tiles (double-buffered)
        + 2 * tm * H * 4)                 # f32 matmul/GELU intermediates
    use_resident = (not force_streaming) and (resident_bytes <= vmem_budget)

    if use_resident:
        n_tok_tiles = pl.cdiv(tokens, tm)
        bytes_accessed = (tokens * D * x_isz + tokens * D * o_isz
                          + (D * H + H * D) * w_isz)
        out2d = pl.pallas_call(
            _ffn_resident_kernel,
            out_shape=jax.ShapeDtypeStruct((tokens, D), x.dtype),
            grid_spec=pltpu.PrefetchScalarGridSpec(
                num_scalar_prefetch=0,
                grid=(n_tok_tiles,),
                in_specs=[
                    pl.BlockSpec((tm, D), lambda i: (i, 0)),   # token tile
                    pl.BlockSpec((D, H), lambda i: (0, 0)),    # W1 resident
                    pl.BlockSpec((H, D), lambda i: (0, 0)),    # W2 resident
                ],
                out_specs=pl.BlockSpec((tm, D), lambda i: (i, 0)),
            ),
            compiler_params=pltpu.CompilerParams(
                dimension_semantics=("parallel",),
                vmem_limit_bytes=int(vmem_budget),
            ),
            cost_estimate=pl.CostEstimate(
                flops=int(flops),
                transcendentals=int(transcendentals),
                bytes_accessed=int(bytes_accessed)),
        )(x2d, w1, w2)
        return out2d.reshape(B, S, D)

    # ---- streaming path: weights stream per token tile --------------------
    th = _pick_hidden_tile(H, block_hidden)

    def stream_working(tm_, th_):
        return (2 * tm_ * D * x_isz                 # x tiles
                + 2 * tm_ * D * o_isz               # out tiles
                + 2 * (D * th_ + th_ * D) * w_isz   # weight tiles
                + tm_ * D * 4                       # f32 accumulator scratch
                + 2 * tm_ * th_ * 4)                # f32 intermediates

    # Shrink th, then tm, until the working set fits the generation budget.
    bh = block_hidden
    while stream_working(tm, th) > vmem_budget and th > 128:
        bh = max(128, bh // 2)
        new_th = _pick_hidden_tile(H, bh)
        if new_th == th:
            break
        th = new_th
    while stream_working(tm, th) > vmem_budget and tm > 64:
        tm = max(8, _round_up(tm // 2, 8))

    n_tok_tiles = pl.cdiv(tokens, tm)
    bytes_accessed = (tokens * D * x_isz + tokens * D * o_isz
                      + n_tok_tiles * (D * H + H * D) * w_isz)

    out2d = pl.pallas_call(
        _ffn_stream_kernel,
        out_shape=jax.ShapeDtypeStruct((tokens, D), x.dtype),
        grid_spec=pltpu.PrefetchScalarGridSpec(
            num_scalar_prefetch=0,
            grid=(n_tok_tiles, H // th),
            in_specs=[
                pl.BlockSpec((tm, D), lambda i, h: (i, 0)),   # token tile
                pl.BlockSpec((D, th), lambda i, h: (0, h)),   # W1 hidden slice
                pl.BlockSpec((th, D), lambda i, h: (h, 0)),   # W2 hidden slice
            ],
            out_specs=pl.BlockSpec((tm, D), lambda i, h: (i, 0)),
            scratch_shapes=[pltpu.VMEM((tm, D), jnp.float32)],
        ),
        compiler_params=pltpu.CompilerParams(
            dimension_semantics=("parallel", "arbitrary"),
            vmem_limit_bytes=int(vmem_budget),
        ),
        cost_estimate=pl.CostEstimate(
            flops=int(flops),
            transcendentals=int(transcendentals),
            bytes_accessed=int(bytes_accessed)),
    )(x2d, w1, w2)
    return out2d.reshape(B, S, D)


# ---------------------------------------------------------------------------
# Params / reference
# ---------------------------------------------------------------------------

def init_params(key, d_model, dtype=jnp.float32):
    """Kaiming-uniform-ish init matching nn.Linear(bias=False) bounds.

    PyTorch stores Linear weights as (out, in); we store pre-transposed
    (in, out) so the kernel computes x @ W directly.
    """
    k1, k2 = jax.random.split(key)
    hidden = 4 * d_model
    bound1 = 1.0 / math.sqrt(d_model)   # c_fc:  in = d_model
    bound2 = 1.0 / math.sqrt(hidden)    # c_proj: in = 4*d_model
    w1 = jax.random.uniform(k1, (d_model, hidden), jnp.float32, -bound1, bound1)
    w2 = jax.random.uniform(k2, (hidden, d_model), jnp.float32, -bound2, bound2)
    return w1.astype(dtype), w2.astype(dtype)


def _reference(x, w1, w2):
    h = x.astype(jnp.float32) @ w1.astype(jnp.float32)
    h = 0.5 * h * (1.0 + lax.erf(h / jnp.float32(math.sqrt(2.0))))
    return h @ w2.astype(jnp.float32)


if __name__ == "__main__":
    d_model = 32
    batch, seq = 2, 8

    key = jax.random.PRNGKey(0)
    kx, kp = jax.random.split(key)
    x = jax.random.normal(kx, (batch, seq, d_model), dtype=jnp.float32)
    w1, w2 = init_params(kp, d_model)
    ref = _reference(x.reshape(-1, d_model), w1, w2).reshape(batch, seq, d_model)

    # f32, resident fast path (weights fit VMEM trivially at this size).
    out = jax.block_until_ready(feed_forward_nn(x, w1, w2))
    assert out.shape == (batch, seq, d_model)
    assert jnp.allclose(out, ref.astype(out.dtype), atol=1e-5, rtol=1e-5)

    # f32, forced streaming path (exercises the accumulator grid).
    out_s = jax.block_until_ready(feed_forward_nn(x, w1, w2, force_streaming=True))
    assert jnp.allclose(out_s, ref.astype(out_s.dtype), atol=1e-5, rtol=1e-5)

    # Uneven token count (tokens not a multiple of the sublane-aligned tile):
    # exercises the no-pad cdiv grid + masked last-block writeback.
    xu = x[:, :7, :]
    refu = _reference(xu.reshape(-1, d_model), w1, w2).reshape(batch, 7, d_model)
    outu = jax.block_until_ready(feed_forward_nn(xu, w1, w2))
    assert outu.shape == (batch, 7, d_model)
    assert jnp.allclose(outu, refu.astype(outu.dtype), atol=1e-5, rtol=1e-5)

    # bf16 path (full-rate MXU operands; accumulation stays f32) -> loose tol.
    # Note: the GELU activation is cast to bf16 before c_proj (intentional
    # precision trade vs a pure-f32 torch reference).
    xb = x.astype(jnp.bfloat16)
    w1b, w2b = w1.astype(jnp.bfloat16), w2.astype(jnp.bfloat16)
    out_bf = jax.block_until_ready(feed_forward_nn(xb, w1b, w2b))
    ref_bf = _reference(xb.reshape(-1, d_model), w1b, w2b).reshape(batch, seq, d_model)
    assert out_bf.shape == (batch, seq, d_model)
    assert jnp.allclose(out_bf.astype(jnp.float32), ref_bf, atol=1e-1, rtol=1e-1)

    print("KERNEL_OK")
</pallas_src>

<mosaic_0001>
module attributes {stable_mosaic.version = 11 : i64} {
  func.func @_ffn_resident_kernel(%arg0: i32, %arg1: memref<16x32xf32, #tpu.memory_space<vmem>>, %arg2: memref<32x128xf32, #tpu.memory_space<vmem>>, %arg3: memref<128x32xf32, #tpu.memory_space<vmem>>, %arg4: memref<16x32xf32, #tpu.memory_space<vmem>>) attributes {dimension_semantics = [#tpu.dimension_semantics<parallel>], iteration_bounds = array<i64: 1>, scalar_prefetch = 0 : i64, scratch_operands = 0 : i64, tpu.core_type = #tpu.core_type<tc>, window_params = [{transform_indices = @transform_0, window_bounds = array<i64: 16, 32>}, {pipeline_mode = #tpu.pipeline_mode<synchronous>, transform_indices = @transform_1, window_bounds = array<i64: 32, 128>}, {pipeline_mode = #tpu.pipeline_mode<synchronous>, transform_indices = @transform_2, window_bounds = array<i64: 128, 32>}, {transform_indices = @transform_3, window_bounds = array<i64: 16, 32>}]} {
    %c0 = arith.constant 0 : index
    %c0_0 = arith.constant 0 : index
    %0 = vector.load %arg1[%c0, %c0_0] : memref<16x32xf32, #tpu.memory_space<vmem>>, vector<16x32xf32>
    %c0_1 = arith.constant 0 : index
    %c0_2 = arith.constant 0 : index
    %1 = vector.load %arg2[%c0_1, %c0_2] : memref<32x128xf32, #tpu.memory_space<vmem>>, vector<32x128xf32>
    %cst = arith.constant dense<0.000000e+00> : vector<16x128xf32>
    %2 = tpu.matmul %0, %1, %cst {dimension_numbers = #tpu.dot_dimension_numbers<[1], [0], [0], [1], [0, 0, 1, 1], [], []>} : vector<16x32xf32>, vector<32x128xf32>, vector<16x128xf32> -> vector<16x128xf32>
    %cst_3 = arith.constant 5.000000e-01 : f32
    %3 = vector.broadcast %cst_3 : f32 to vector<16x128xf32>
    %4 = arith.mulf %3, %2 : vector<16x128xf32>
    %cst_4 = arith.constant 0.707106769 : f32
    %5 = vector.broadcast %cst_4 : f32 to vector<16x128xf32>
    %6 = arith.mulf %2, %5 : vector<16x128xf32>
    %7 = math.erf %6 : vector<16x128xf32>
    %cst_5 = arith.constant 1.000000e+00 : f32
    %8 = vector.broadcast %cst_5 : f32 to vector<16x128xf32>
    %9 = arith.addf %8, %7 : vector<16x128xf32>
    %10 = arith.mulf %4, %9 : vector<16x128xf32>
    %c0_6 = arith.constant 0 : index
    %c0_7 = arith.constant 0 : index
    %11 = vector.load %arg3[%c0_6, %c0_7] : memref<128x32xf32, #tpu.memory_space<vmem>>, vector<128x32xf32>
    %cst_8 = arith.constant dense<0.000000e+00> : vector<16x32xf32>
    %12 = tpu.matmul %10, %11, %cst_8 {dimension_numbers = #tpu.dot_dimension_numbers<[1], [0], [0], [1], [0, 0, 1, 1], [], []>} : vector<16x128xf32>, vector<128x32xf32>, vector<16x32xf32> -> vector<16x32xf32>
    %c0_9 = arith.constant 0 : index
    %c0_10 = arith.constant 0 : index
    %13 = vector.load %arg4[%c0_9, %c0_10] : memref<16x32xf32, #tpu.memory_space<vmem>>, vector<16x32xf32>
    tpu.vector_store %arg4[%c0_9, %c0_10], %12 {strides = array<i32>} : memref<16x32xf32, #tpu.memory_space<vmem>>, vector<16x32xf32>,
    return
  }
  func.func @transform_0(%arg0: i32) -> (i32, i32) {
    %c0_i32 = arith.constant 0 : i32
    %c0_i32_0 = arith.constant 0 : i32
    return %arg0, %c0_i32 : i32, i32
  }
  func.func @transform_1(%arg0: i32) -> (i32, i32) {
    %c0_i32 = arith.constant 0 : i32
    %c0_i32_0 = arith.constant 0 : i32
    %c0_i32_1 = arith.constant 0 : i32
    return %c0_i32, %c0_i32_0 : i32, i32
  }
  func.func @transform_2(%arg0: i32) -> (i32, i32) {
    %c0_i32 = arith.constant 0 : i32
    %c0_i32_0 = arith.constant 0 : i32
    %c0_i32_1 = arith.constant 0 : i32
    return %c0_i32, %c0_i32_0 : i32, i32
  }
  func.func @transform_3(%arg0: i32) -> (i32, i32) {
    %c0_i32 = arith.constant 0 : i32
    %c0_i32_0 = arith.constant 0 : i32
    return %arg0, %c0_i32 : i32, i32
  }
}

</mosaic_0001>

<llo_original>
// kernel: feed_forward_nn.1
$region0: #{feed_forward_nn.1}
  #allocation0 [shape = 'u32[]', space=smem, size = 0x4, offset = 0x4, fixed_abs, tag = 'smem constant byte address 0x4 - core index']
  #allocation1 [shape = 'u32[144,128]{1,0:T(1,128)}', space=vmem, size = 0x12000, scoped, tag = 'internal scratch']
  %s0 = inlined_call_operand.vmem [shape: f32[16,32], index: 0, kind: input, shape index: {}]
  %s1 = inlined_call_operand.vmem [shape: f32[32,128], index: 1, kind: input, shape index: {}]
  %s2 = inlined_call_operand.vmem [shape: f32[128,32], index: 2, kind: input, shape index: {}]
  %s3 = inlined_call_operand.hbm [shape: f32[16,32], index: 3, kind: output, shape index: {}]
  %s4 = sld [smem:[#allocation0]]
  $region22: #{feed_forward_nn.1} parent=0
    _
  %s6 = ssub.s32 1, %s4
  %s7 = scalar_select 0, %s6, %s4
  $region1: #{feed_forward_nn.1} parent=0
    #allocation2 [shape = 'u8[8192]{0}', space=vmem, size = 0x2000, scoped, tag = 'output window, operand 0, single buffered']
    #allocation3 [shape = 's32[1]{0}', space=sflag, size = 0x4, scoped, tag = 'scoped memory for feed_forward_nn.1']
    %8 = vsyncpa [#allocation3], 0
    // Predicated region
    $region2: #{feed_forward_nn.1} parent=1 // pred_check
      _
    $region3: #{feed_forward_nn.1} parent=1 // pred_check_branch
      %10 = sbr.rel (0) target = $region5
    $region4: #{feed_forward_nn.1} parent=1 // pred_region
      _
    $region5: #{feed_forward_nn.1} parent=1 // pred_fallthru
      _
    // Predicated region
    $region6: #{feed_forward_nn.1} parent=1 // pred_check
      _
    $region7: #{feed_forward_nn.1} parent=1 // pred_check_branch
      %12 = sbr.rel (0) target = $region9
    $region8: #{feed_forward_nn.1} parent=1 // pred_region
      _
    $region9: #{feed_forward_nn.1} parent=1 // pred_fallthru
      _
    // Predicated region
    $region10: #{feed_forward_nn.1} parent=1 // pred_check
      _
    $region11: #{feed_forward_nn.1} parent=1 // pred_check_branch
      %14 = sbr.rel (0) target = $region13
    $region12: #{feed_forward_nn.1} parent=1 // pred_region
      _
    $region13: #{feed_forward_nn.1} parent=1 // pred_fallthru
      _
    %v15 = vld [vmem:[%s0] sm:$0xff]
    %v16 = vld [vmem:[%s0 + $0x8] sm:$0xff]
    %v17 = vld [vmem:[%s1] sm:$0xff]
    %v18 = vld [vmem:[%s1 + $0x8] sm:$0xff]
    %v19 = vld [vmem:[%s1 + $0x10] sm:$0xff]
    %v20 = vld [vmem:[%s1 + $0x18] sm:$0xff]
    %vm21 = vcmask 261120
    %v23 = vsel %vm21, %v15, 0
    %v26 = vsel %vm21, %v16, 0
    %28 = vmatprep.subr.mxu0 0.0
    %29 = vmatpush1.msra.mxu0 %v17
    %30 = vmatprep.subr.mxu0 0.0
    %31 = vmatpush1.msra.mxu0 %v18
    %32 = vmatprep.subr.mxu0 0.0
    %33 = vmatpush1.msra.mxu0 %v19
    %34 = vmatprep.subr.mxu0 0.0
    %35 = vmatpush1.msra.mxu0 %v20
    %36 = vmatprep.subr.mxu0 0.0
    %37 = vmatpush1.msra.mxu0 0.0
    %38 = vmatprep.subr.mxu0 0.0
    %39 = vmatpush1.msra.mxu0 0.0
    %40 = vmatprep.subr.mxu0 0.0
    %41 = vmatpush1.msra.mxu0 0.0
    %42 = vmatprep.subr.mxu0 0.0
    %43 = vmatpush1.msra.mxu0 0.0
    %44 = vmatprep.subr.mxu0 0.0
    %45 = vmatpush1.msra.mxu0 0.0
    %46 = vmatprep.subr.mxu0 0.0
    %47 = vmatpush1.msra.mxu0 0.0
    %48 = vmatprep.subr.mxu0 0.0
    %49 = vmatpush1.msra.mxu0 0.0
    %50 = vmatprep.subr.mxu0 0.0
    %51 = vmatpush1.msra.mxu0 0.0
    %52 = vmatprep.subr.mxu0 0.0
    %53 = vmatpush1.msra.mxu0 0.0
    %54 = vmatprep.subr.mxu0 0.0
    %55 = vmatpush1.msra.mxu0 0.0
    %56 = vmatprep.subr.mxu0 0.0
    %57 = vmatpush1.msra.mxu0 0.0
    %58 = vmatprep.subr.mxu0 0.0
    %59 = vmatpush1.msra.mxu0 0.0
    %60 = vmatprep.subr.mxu0 0.0
    %61 = vmatpush1.msra.mxu0 0.0
    %62 = vmatprep.subr.mxu0 0.0
    %63 = vmatpush1.msra.mxu0 0.0
    %64 = vmatprep.subr.mxu0 0.0
    %65 = vmatpush1.msra.mxu0 0.0
    %66 = vmatprep.subr.mxu0 0.0
    %67 = vmatpush1.msra.mxu0 0.0
    %68 = vmatprep.subr.mxu0 0.0
    %69 = vmatpush1.msra.mxu0 0.0
    %70 = vmatprep.subr.mxu0 0.0
    %71 = vmatpush1.msra.mxu0 0.0
    %72 = vmatprep.subr.mxu0 0.0
    %73 = vmatpush1.msra.mxu0 0.0
    %74 = vmatprep.subr.mxu0 0.0
    %75 = vmatpush1.msra.mxu0 0.0
    %76 = vmatprep.subr.mxu0 0.0
    %77 = vmatpush1.msra.mxu0 0.0
    %78 = vmatprep.subr.mxu0 0.0
    %79 = vmatpush1.msra.mxu0 0.0
    %80 = vmatprep.subr.mxu0 0.0
    %81 = vmatpush1.msra.mxu0 0.0
    %82 = vmatprep.subr.mxu0 0.0
    %83 = vmatpush1.msra.mxu0 0.0
    %84 = vmatprep.subr.mxu0 0.0
    %85 = vmatpush1.msra.mxu0 0.0
    %86 = vmatprep.subr.mxu0 0.0
    %87 = vmatpush1.msra.mxu0 0.0
    %88 = vmatprep.subr.mxu0 0.0
    %89 = vmatpush1.msra.mxu0 0.0
    %90 = vmatprep.subr.mxu0 0.0
    %91 = vmatpush1.msra.mxu0 0.0
    %92 = vmatprep.mubr.f32.mxu0 0.0
    %93 = vmatmul.mubr.f32.gmra.mrb[0].mxu0 %v23
    %v94 = vpop.f32.mrb[0].mxu0
    %v95 = vadd.f32 0.0, %v94
    %v96 = vpop.f32.mrb[0].mxu0
    %97 = vmatprep.mubr.f32.mxu0 0.0
    %98 = vmatmul.mubr.f32.gmra.mrb[0].mxu0 %v26
    %v99 = vpop.f32.mrb[0].mxu0
    %v100 = vadd.f32 0.0, %v99
    %v101 = vpop.f32.mrb[0].mxu0
    %102 = vdwg.mxu0
    %v103 = vmul.f32 %v95, 0.5
    %v104 = vmul.f32 %v100, 0.5
    %v105 = vmul.f32 %v95, 0.70710677
    %v106 = vmul.f32 %v100, 0.70710677
    %v107 = verf.f32.pop %v105
    %v108 = verf.f32.pop %v106
    %v109 = vadd.f32 %v107, 1.0
    %v110 = vadd.f32 %v108, 1.0
    %v111 = vmul.f32 %v103, %v109
    %v112 = vmul.f32 %v104, %v110
    %v113 = vld [vmem:[%s2] sm:$0xff]
    %v114 = vld [vmem:[%s2 + $0x8] sm:$0xff]
    %v115 = vld [vmem:[%s2 + $0x10] sm:$0xff]
    %v116 = vld [vmem:[%s2 + $0x18] sm:$0xff]
    %v117 = vld [vmem:[%s2 + $0x20] sm:$0xff]
    %v118 = vld [vmem:[%s2 + $0x28] sm:$0xff]
    %v119 = vld [vmem:[%s2 + $0x30] sm:$0xff]
    %v120 = vld [vmem:[%s2 + $0x38] sm:$0xff]
    %v121 = vld [vmem:[%s2 + $0x40] sm:$0xff]
    %v122 = vld [vmem:[%s2 + $0x48] sm:$0xff]
    %v123 = vld [vmem:[%s2 + $0x50] sm:$0xff]
    %v124 = vld [vmem:[%s2 + $0x58] sm:$0xff]
    %v125 = vld [vmem:[%s2 + $0x60] sm:$0xff]
    %v126 = vld [vmem:[%s2 + $0x68] sm:$0xff]
    %v127 = vld [vmem:[%s2 + $0x70] sm:$0xff]
    %v128 = vld [vmem:[%s2 + $0x78] sm:$0xff]
    %129 = vmatprep.subr.mxu0 0.0
    %130 = vmatpush1.msra.mxu0 %v113
    %131 = vmatprep.subr.mxu0 0.0
    %132 = vmatpush1.msra.mxu0 %v114
    %133 = vmatprep.subr.mxu0 0.0
    %134 = vmatpush1.msra.mxu0 %v115
    %135 = vmatprep.subr.mxu0 0.0
    %136 = vmatpush1.msra.mxu0 %v116
    %137 = vmatprep.subr.mxu0 0.0
    %138 = vmatpush1.msra.mxu0 %v117
    %139 = vmatprep.subr.mxu0 0.0
    %140 = vmatpush1.msra.mxu0 %v118
    %141 = vmatprep.subr.mxu0 0.0
    %142 = vmatpush1.msra.mxu0 %v119
    %143 = vmatprep.subr.mxu0 0.0
    %144 = vmatpush1.msra.mxu0 %v120
    %145 = vmatprep.subr.mxu0 0.0
    %146 = vmatpush1.msra.mxu0 %v121
    %147 = vmatprep.subr.mxu0 0.0
    %148 = vmatpush1.msra.mxu0 %v122
    %149 = vmatprep.subr.mxu0 0.0
    %150 = vmatpush1.msra.mxu0 %v123
    %151 = vmatprep.subr.mxu0 0.0
    %152 = vmatpush1.msra.mxu0 %v124
    %153 = vmatprep.subr.mxu0 0.0
    %154 = vmatpush1.msra.mxu0 %v125
    %155 = vmatprep.subr.mxu0 0.0
    %156 = vmatpush1.msra.mxu0 %v126
    %157 = vmatprep.subr.mxu0 0.0
    %158 = vmatpush1.msra.mxu0 %v127
    %159 = vmatprep.subr.mxu0 0.0
    %160 = vmatpush1.msra.mxu0 %v128
    %161 = vmatprep.subr.mxu0 0.0
    %162 = vmatpush1.msra.mxu0 0.0
    %163 = vmatprep.subr.mxu0 0.0
    %164 = vmatpush1.msra.mxu0 0.0
    %165 = vmatprep.subr.mxu0 0.0
    %166 = vmatpush1.msra.mxu0 0.0
    %167 = vmatprep.subr.mxu0 0.0
    %168 = vmatpush1.msra.mxu0 0.0
    %169 = vmatprep.subr.mxu0 0.0
    %170 = vmatpush1.msra.mxu0 0.0
    %171 = vmatprep.subr.mxu0 0.0
    %172 = vmatpush1.msra.mxu0 0.0
    %173 = vmatprep.subr.mxu0 0.0
    %174 = vmatpush1.msra.mxu0 0.0
    %175 = vmatprep.subr.mxu0 0.0
    %176 = vmatpush1.msra.mxu0 0.0
    %177 = vmatprep.subr.mxu0 0.0
    %178 = vmatpush1.msra.mxu0 0.0
    %179 = vmatprep.subr.mxu0 0.0
    %180 = vmatpush1.msra.mxu0 0.0
    %181 = vmatprep.subr.mxu0 0.0
    %182 = vmatpush1.msra.mxu0 0.0
    %183 = vmatprep.subr.mxu0 0.0
    %184 = vmatpush1.msra.mxu0 0.0
    %185 = vmatprep.subr.mxu0 0.0
    %186 = vmatpush1.msra.mxu0 0.0
    %187 = vmatprep.subr.mxu0 0.0
    %188 = vmatpush1.msra.mxu0 0.0
    %189 = vmatprep.subr.mxu0 0.0
    %190 = vmatpush1.msra.mxu0 0.0
    %191 = vmatprep.subr.mxu0 0.0
    %192 = vmatpush1.msra.mxu0 0.0
    %193 = vmatprep.mubr.f32.mxu0 0.0
    %194 = vmatmul.mubr.f32.gmra.mrb[0].mxu0 %v111
    %v195 = vpop.f32.mrb[0].mxu0
    %v196 = vadd.f32 0.0, %v195
    %v197 = vpop.f32.mrb[0].mxu0
    %198 = vmatprep.mubr.f32.mxu0 0.0
    %199 = vmatmul.mubr.f32.gmra.mrb[0].mxu0 %v112
    %v200 = vpop.f32.mrb[0].mxu0
    %v201 = vadd.f32 0.0, %v200
    %v202 = vpop.f32.mrb[0].mxu0
    %203 = vdwg.mxu0
    %204 = vst.msk [vmem:[#allocation2] sm:$0xff] %vm21, %v196
    %205 = vst.msk [vmem:[#allocation2 + $0x8] sm:$0xff] %vm21, %v201
    // Predicated region
    $region14: #{feed_forward_nn.1} parent=1 // pred_check
      _
    $region15: #{feed_forward_nn.1} parent=1 // pred_check_branch
      %207 = sbr.rel (0) target = $region17
    $region16: #{feed_forward_nn.1} parent=1 // pred_region
      %s209 = ssub.s32 256, 256
      %210 = vsyncadd [#allocation3], %s209
      %s211 = sshll.u32 [#allocation2], 4
      %s212 = int_to_ptr.vmem [resolvable:$true] %s211
      %217 = dma.vmem_to_hbm [thread:$0]  %s212, 256, %s3, [#allocation3], 128, 128, 8
    $region17: #{feed_forward_nn.1} parent=1 // pred_fallthru
      _
    // Predicated region
    $region18: #{feed_forward_nn.1} parent=1 // pred_check
      _
    $region19: #{feed_forward_nn.1} parent=1 // pred_check_branch
      %219 = sbr.rel (0) target = $region21
    $region20: #{feed_forward_nn.1} parent=1 // pred_region
      %220 = dma.done [#allocation3], 256
    $region21: #{feed_forward_nn.1} parent=1 // pred_fallthru
      _
    %221 = vsyncpa [#allocation3], 1

</llo_original>
